<compile_context>
chip_gen: v6e
topology: v6e:2x2x1
jax: 0.10.0
libtpu: 0.0.40
codegen_flags: <defaults>
</compile_context>

<pallas_src>
import math

import jax
import jax.numpy as jnp
from jax.experimental import pallas as pl
from jax.experimental.pallas import tpu as pltpu

IN_FEATURES = 300
OUT_FEATURES = 100
DEFAULT_TILE_M = 2048   # safe on v5e's 16 MiB scoped VMEM; use 4096-8192 on v6e/v7x
_MIN_SPLIT_M = 512      # above this, force >=2 grid steps so v7x's 2nd TC has work


def _fc_kernel(x_ref, w_ref, b_ref, o_ref):
    # x_ref: [TM, 300], w_ref: [300, 100] (resident), b_ref: [1, 100], o_ref: [TM, 100]
    acc = jnp.dot(x_ref[...], w_ref[...], preferred_element_type=jnp.float32)  # MXU, fp32 acc
    o_ref[...] = (acc + b_ref[...]).astype(o_ref.dtype)


def prepare_params(weight, bias):
    """One-time param prep: transpose [100,300] -> [300,100], bias -> [1,100].

    No column padding: the kernel now writes the true 100-wide output, which
    avoids an extra post-kernel slice pass over HBM.
    """
    return weight.T, bias.reshape(1, OUT_FEATURES)


def _round_up(v, m):
    return ((v + m - 1) // m) * m


def _select_tile_m(m, tile_m):
    """Pick the M tile.

    * Small M: a single full-M block (block dim == array dim is always legal,
      no divisibility requirement, no wasted grid-step overhead).
    * Large M: at least 2 blocks (so "parallel" can shard across v7x's two
      TensorCores) of at most ~tile_m rows, rounded to a multiple of 8.
    """
    if m < _MIN_SPLIT_M:
        return m
    n_blocks = max(2, pl.cdiv(m, tile_m))
    return _round_up(pl.cdiv(m, n_blocks), 8)


def ensemble_fc_forward(x, w_t, b_row, *, tile_m=DEFAULT_TILE_M, out_dtype=None):
    """Equivalent of classEnsembleFCNet.forward.

    x:      any shape with total elements divisible by 300
    w_t:    [300, 100]  (pre-transposed weight from prepare_params)
    b_row:  [1, 100]    (bias row from prepare_params)
    returns: [M, 100] where M = x.size // 300
    """
    x2d = x.reshape(-1, IN_FEATURES)        # glue reshape in plain JAX
    m = x2d.shape[0]
    out_dtype = x2d.dtype if out_dtype is None else out_dtype

    tm = _select_tile_m(m, tile_m)
    grid_m = pl.cdiv(m, tm)

    out = pl.pallas_call(
        _fc_kernel,
        out_shape=jax.ShapeDtypeStruct((m, OUT_FEATURES), out_dtype),
        grid_spec=pltpu.PrefetchScalarGridSpec(
            num_scalar_prefetch=0,
            grid=(grid_m,),
            in_specs=[
                # x tile marches down M; weight/bias stay resident (const idx).
                # TODO(synk): if profiles show exposed DMA waits at large TM,
                # try pipeline_mode=pl.Buffered(3) on this spec.
                pl.BlockSpec((tm, IN_FEATURES), lambda i: (i, 0)),
                pl.BlockSpec((IN_FEATURES, OUT_FEATURES), lambda i: (0, 0)),
                pl.BlockSpec((1, OUT_FEATURES), lambda i: (0, 0)),
            ],
            out_specs=pl.BlockSpec((tm, OUT_FEATURES), lambda i: (i, 0)),
        ),
        compiler_params=pltpu.CompilerParams(
            dimension_semantics=("parallel",),   # rows independent -> megacore
        ),
        cost_estimate=pl.CostEstimate(
            flops=2 * m * IN_FEATURES * OUT_FEATURES,
            transcendentals=0,
            bytes_accessed=(x2d.dtype.itemsize * m * IN_FEATURES
                            + w_t.dtype.itemsize * IN_FEATURES * OUT_FEATURES
                            + b_row.dtype.itemsize * OUT_FEATURES
                            + jnp.dtype(out_dtype).itemsize * m * OUT_FEATURES),
        ),
    )(x2d, w_t, b_row)

    return out


def init_params(key):
    """Deterministic init matching nn.Linear(300, 100) shapes & bound."""
    k_w, k_b = jax.random.split(key)
    bound = 1.0 / math.sqrt(IN_FEATURES)
    weight = jax.random.uniform(
        k_w, (OUT_FEATURES, IN_FEATURES), jnp.float32, -bound, bound)
    bias = jax.random.uniform(
        k_b, (OUT_FEATURES,), jnp.float32, -bound, bound)
    return weight, bias


if __name__ == "__main__":
    key = jax.random.PRNGKey(0)
    k_x, k_p = jax.random.split(key)

    # Input whose forward reshape gives (-1, 300): here (2, 3, 100) -> (2, 300)
    x = jax.random.normal(k_x, (2, 3, 100), dtype=jnp.float32)
    weight, bias = init_params(k_p)
    w_t, b_row = prepare_params(weight, bias)    # done once, outside hot path

    out = ensemble_fc_forward(x, w_t, b_row)
    out = jax.block_until_ready(out)

    # Reference check in plain JAX.
    ref = x.reshape(-1, IN_FEATURES) @ weight.T + bias
    assert out.shape == (2, OUT_FEATURES)
    assert jnp.allclose(out, ref, atol=1e-4, rtol=1e-4)

    print("KERNEL_OK")
</pallas_src>

<mosaic_0001>
module attributes {stable_mosaic.version = 11 : i64} {
  func.func @_fc_kernel(%arg0: i32, %arg1: memref<2x300xf32, #tpu.memory_space<vmem>>, %arg2: memref<300x100xf32, #tpu.memory_space<vmem>>, %arg3: memref<1x100xf32, #tpu.memory_space<vmem>>, %arg4: memref<2x100xf32, #tpu.memory_space<vmem>>) attributes {dimension_semantics = [#tpu.dimension_semantics<parallel>], iteration_bounds = array<i64: 1>, scalar_prefetch = 0 : i64, scratch_operands = 0 : i64, tpu.core_type = #tpu.core_type<tc>, window_params = [{transform_indices = @transform_0, window_bounds = array<i64: 2, 300>}, {pipeline_mode = #tpu.pipeline_mode<synchronous>, transform_indices = @transform_1, window_bounds = array<i64: 300, 100>}, {pipeline_mode = #tpu.pipeline_mode<synchronous>, transform_indices = @transform_2, window_bounds = array<i64: 1, 100>}, {transform_indices = @transform_3, window_bounds = array<i64: 2, 100>}]} {
    %c0 = arith.constant 0 : index
    %c0_0 = arith.constant 0 : index
    %0 = vector.load %arg1[%c0, %c0_0] : memref<2x300xf32, #tpu.memory_space<vmem>>, vector<2x300xf32>
    %c0_1 = arith.constant 0 : index
    %c0_2 = arith.constant 0 : index
    %1 = vector.load %arg2[%c0_1, %c0_2] : memref<300x100xf32, #tpu.memory_space<vmem>>, vector<300x100xf32>
    %cst = arith.constant dense<0.000000e+00> : vector<2x100xf32>
    %2 = tpu.matmul %0, %1, %cst {dimension_numbers = #tpu.dot_dimension_numbers<[1], [0], [0], [1], [0, 0, 1, 1], [], []>} : vector<2x300xf32>, vector<300x100xf32>, vector<2x100xf32> -> vector<2x100xf32>
    %c0_3 = arith.constant 0 : index
    %c0_4 = arith.constant 0 : index
    %3 = vector.load %arg3[%c0_3, %c0_4] : memref<1x100xf32, #tpu.memory_space<vmem>>, vector<1x100xf32>
    %4 = vector.broadcast %3 : vector<1x100xf32> to vector<2x100xf32>
    %5 = arith.addf %2, %4 : vector<2x100xf32>
    %c0_5 = arith.constant 0 : index
    %c0_6 = arith.constant 0 : index
    %6 = vector.load %arg4[%c0_5, %c0_6] : memref<2x100xf32, #tpu.memory_space<vmem>>, vector<2x100xf32>
    tpu.vector_store %arg4[%c0_5, %c0_6], %5 {strides = array<i32>} : memref<2x100xf32, #tpu.memory_space<vmem>>, vector<2x100xf32>,
    return
  }
  func.func @transform_0(%arg0: i32) -> (i32, i32) {
    %c0_i32 = arith.constant 0 : i32
    %c0_i32_0 = arith.constant 0 : i32
    return %arg0, %c0_i32 : i32, i32
  }
  func.func @transform_1(%arg0: i32) -> (i32, i32) {
    %c0_i32 = arith.constant 0 : i32
    %c0_i32_0 = arith.constant 0 : i32
    %c0_i32_1 = arith.constant 0 : i32
    return %c0_i32, %c0_i32_0 : i32, i32
  }
  func.func @transform_2(%arg0: i32) -> (i32, i32) {
    %c0_i32 = arith.constant 0 : i32
    %c0_i32_0 = arith.constant 0 : i32
    %c0_i32_1 = arith.constant 0 : i32
    return %c0_i32, %c0_i32_0 : i32, i32
  }
  func.func @transform_3(%arg0: i32) -> (i32, i32) {
    %c0_i32 = arith.constant 0 : i32
    %c0_i32_0 = arith.constant 0 : i32
    return %arg0, %c0_i32 : i32, i32
  }
}

</mosaic_0001>

<llo_original>
// kernel: tpu_custom_call.1
$region0: #{tpu_custom_call.1}
  #allocation0 [shape = 'u32[]', space=smem, size = 0x4, offset = 0x4, fixed_abs, tag = 'smem constant byte address 0x4 - core index']
  #allocation1 [shape = 'u32[144,128]{1,0:T(1,128)}', space=vmem, size = 0x12000, scoped, tag = 'internal scratch']
  %s0 = inlined_call_operand.hbm [shape: f32[2,300], index: 0, kind: input, shape index: {}]
  %s1 = inlined_call_operand.hbm [shape: f32[300,100], index: 1, kind: input, shape index: {}]
  %s2 = inlined_call_operand.vmem [shape: f32[1,100], index: 2, kind: input, shape index: {}]
  %s3 = inlined_call_operand.hbm [shape: f32[2,100], index: 3, kind: output, shape index: {}]
  %s4 = sld [smem:[#allocation0]]
  $region30: #{tpu_custom_call.1} parent=0
    _
  %s6 = ssub.s32 1, %s4
  %s7 = scalar_select 0, %s6, %s4
  $region1: #{tpu_custom_call.1} parent=0
    #allocation2 [shape = 'u8[3072]{0}', space=vmem, size = 0xc00, scoped, tag = 'input window, operand 0, single buffered']
    #allocation3 [shape = 's32[1]{0}', space=sflag, size = 0x4, scoped, tag = 'scoped memory for tpu_custom_call.1']
    #allocation4 [shape = 's32[1]{0}', space=sflag, size = 0x4, scoped, tag = 'scoped memory for tpu_custom_call.1']
    #allocation5 [shape = 'u8[155648]{0}', space=vmem, size = 0x26000, scoped, tag = 'input window, operand 1, single buffered']
    #allocation6 [shape = 's32[1]{0}', space=sflag, size = 0x4, scoped, tag = 'scoped memory for tpu_custom_call.1']
    #allocation7 [shape = 'u8[1024]{0}', space=vmem, size = 0x400, scoped, tag = 'output window, operand 0, single buffered']
    %8 = vsyncpa [#allocation3], 0
    %9 = vsyncpa [#allocation6], 0
    %10 = vsyncpa [#allocation4], 0
    // Predicated region
    $region2: #{tpu_custom_call.1} parent=1 // pred_check
      _
    $region3: #{tpu_custom_call.1} parent=1 // pred_check_branch
      %12 = sbr.rel (0) target = $region5
    $region4: #{tpu_custom_call.1} parent=1 // pred_region
      %s14 = ssub.s32 96, 96
      %15 = vsyncadd [#allocation3], %s14
      %s17 = sshll.u32 [#allocation2], 4
      %s18 = int_to_ptr.vmem [resolvable:$true] %s17
      %20 = dma.hbm_to_vmem [thread:$0]  %s0, 96, %s18, [#allocation3]
    $region5: #{tpu_custom_call.1} parent=1 // pred_fallthru
      _
    // Predicated region
    $region6: #{tpu_custom_call.1} parent=1 // pred_check
      _
    $region7: #{tpu_custom_call.1} parent=1 // pred_check_branch
      %22 = sbr.rel (0) target = $region9
    $region8: #{tpu_custom_call.1} parent=1 // pred_region
      %s24 = ssub.s32 4864, 4864
      %25 = vsyncadd [#allocation6], %s24
      %s26 = sshll.u32 [#allocation5], 4
      %s27 = int_to_ptr.vmem [resolvable:$true] %s26
      %32 = dma.hbm_to_vmem [thread:$0]  %s1, 4864, %s27, [#allocation6], 128, 128, 8
    $region9: #{tpu_custom_call.1} parent=1 // pred_fallthru
      _
    // Predicated region
    $region10: #{tpu_custom_call.1} parent=1 // pred_check
      _
    $region11: #{tpu_custom_call.1} parent=1 // pred_check_branch
      %34 = sbr.rel (0) target = $region13
    $region12: #{tpu_custom_call.1} parent=1 // pred_region
      _
    $region13: #{tpu_custom_call.1} parent=1 // pred_fallthru
      _
    // Predicated region
    $region14: #{tpu_custom_call.1} parent=1 // pred_check
      _
    $region15: #{tpu_custom_call.1} parent=1 // pred_check_branch
      %36 = sbr.rel (0) target = $region17
    $region16: #{tpu_custom_call.1} parent=1 // pred_region
      %37 = dma.done [#allocation3], 96
    $region17: #{tpu_custom_call.1} parent=1 // pred_fallthru
      _
    // Predicated region
    $region18: #{tpu_custom_call.1} parent=1 // pred_check
      _
    $region19: #{tpu_custom_call.1} parent=1 // pred_check_branch
      %39 = sbr.rel (0) target = $region21
    $region20: #{tpu_custom_call.1} parent=1 // pred_region
      %40 = dma.done [#allocation6], 4864
    $region21: #{tpu_custom_call.1} parent=1 // pred_fallthru
      _
    %v41 = vld [vmem:[#allocation2] sm:$0x3f]
    %v42 = vld [vmem:[#allocation5] sm:$0xff]
    %v43 = vld [vmem:[#allocation5 + $0x8] sm:$0xff]
    %v44 = vld [vmem:[#allocation5 + $0x10] sm:$0xff]
    %v45 = vld [vmem:[#allocation5 + $0x18] sm:$0xff]
    %v46 = vld [vmem:[#allocation5 + $0x20] sm:$0xff]
    %v47 = vld [vmem:[#allocation5 + $0x28] sm:$0xff]
    %v48 = vld [vmem:[#allocation5 + $0x30] sm:$0xff]
    %v49 = vld [vmem:[#allocation5 + $0x38] sm:$0xff]
    %v50 = vld [vmem:[#allocation5 + $0x40] sm:$0xff]
    %v51 = vld [vmem:[#allocation5 + $0x48] sm:$0xff]
    %v52 = vld [vmem:[#allocation5 + $0x50] sm:$0xff]
    %v53 = vld [vmem:[#allocation5 + $0x58] sm:$0xff]
    %v54 = vld [vmem:[#allocation5 + $0x60] sm:$0xff]
    %v55 = vld [vmem:[#allocation5 + $0x68] sm:$0xff]
    %v56 = vld [vmem:[#allocation5 + $0x70] sm:$0xff]
    %v57 = vld [vmem:[#allocation5 + $0x78] sm:$0xff]
    %v58 = vld [vmem:[#allocation5 + $0x80] sm:$0xff]
    %v59 = vld [vmem:[#allocation5 + $0x88] sm:$0xff]
    %v60 = vld [vmem:[#allocation5 + $0x90] sm:$0xff]
    %v61 = vld [vmem:[#allocation5 + $0x98] sm:$0xff]
    %v62 = vld [vmem:[#allocation5 + $0xa0] sm:$0xff]
    %v63 = vld [vmem:[#allocation5 + $0xa8] sm:$0xff]
    %v64 = vld [vmem:[#allocation5 + $0xb0] sm:$0xff]
    %v65 = vld [vmem:[#allocation5 + $0xb8] sm:$0xff]
    %v66 = vld [vmem:[#allocation5 + $0xc0] sm:$0xff]
    %v67 = vld [vmem:[#allocation5 + $0xc8] sm:$0xff]
    %v68 = vld [vmem:[#allocation5 + $0xd0] sm:$0xff]
    %v69 = vld [vmem:[#allocation5 + $0xd8] sm:$0xff]
    %v70 = vld [vmem:[#allocation5 + $0xe0] sm:$0xff]
    %v71 = vld [vmem:[#allocation5 + $0xe8] sm:$0xff]
    %v72 = vld [vmem:[#allocation5 + $0xf0] sm:$0xff]
    %v73 = vld [vmem:[#allocation5 + $0xf8] sm:$0xff]
    %v74 = vld [vmem:[#allocation5 + $0x100] sm:$0xff]
    %v75 = vld [vmem:[#allocation5 + $0x108] sm:$0xff]
    %v76 = vld [vmem:[#allocation5 + $0x110] sm:$0xff]
    %v77 = vld [vmem:[#allocation5 + $0x118] sm:$0xff]
    %v78 = vld [vmem:[#allocation5 + $0x120] sm:$0xff]
    %v79 = vld [vmem:[#allocation5 + $0x128] sm:$0xf]
    %v80 = vld [vmem:[%s2] sm:$0x1]
    %v82 = vlaneseq
    %v83 = vshrl.u32 %v82, 7
    %v84 = vsub.s32 0, %v83
    %v85 = vrot.slane %v80, %v84
    %v88 = vcombine.high %v41, %v41
    %v90 = vunpack.c.l.s4 1983009808
    %v91 = vunpack.c.0.s8 %v90
    %v92 = vlaneseq
    %v93 = vshrl.u32 %v92, 7
    %v94 = vsub.s32 %v91, %v93
    %v95 = vrot.slane %v41, %v94
    %v97 = vunpack.c.l.s4 1983009808
    %v98 = vunpack.c.0.s8 %v97
    %v99 = vlaneseq
    %v100 = vshrl.u32 %v99, 7
    %v101 = vsub.s32 %v98, %v100
    %v102 = vrot.slane %v88, %v101
    %v103 = vcombine.high %v95, %v95
    %vm106 = vcmask 359424
    %v107 = vsel %vm106, %v102, 0
    %vm109 = vcmask 1043456
    %v111 = vsel %vm109, %v79, 0
    %113 = vmatprep.subr.mxu0 0.0
    %114 = vmatpush1.msra.mxu0 %v57
    %115 = vmatprep.subr.mxu0 0.0
    %116 = vmatpush1.msra.mxu0 %v56
    %117 = vmatprep.subr.mxu0 0.0
    %118 = vmatpush1.msra.mxu0 %v55
    %119 = vmatprep.subr.mxu0 0.0
    %120 = vmatpush1.msra.mxu0 %v54
    %121 = vmatprep.subr.mxu0 0.0
    %122 = vmatpush1.msra.mxu0 %v53
    %123 = vmatprep.subr.mxu0 0.0
    %124 = vmatpush1.msra.mxu0 %v52
    %125 = vmatprep.subr.mxu0 0.0
    %126 = vmatpush1.msra.mxu0 %v51
    %127 = vmatprep.subr.mxu0 0.0
    %128 = vmatpush1.msra.mxu0 %v50
    %129 = vmatprep.subr.mxu0 0.0
    %130 = vmatpush1.msra.mxu0 %v49
    %131 = vmatprep.subr.mxu0 0.0
    %132 = vmatpush1.msra.mxu0 %v48
    %133 = vmatprep.subr.mxu0 0.0
    %134 = vmatpush1.msra.mxu0 %v47
    %135 = vmatprep.subr.mxu0 0.0
    %136 = vmatpush1.msra.mxu0 %v46
    %137 = vmatprep.subr.mxu0 0.0
    %138 = vmatpush1.msra.mxu0 %v45
    %139 = vmatprep.subr.mxu0 0.0
    %140 = vmatpush1.msra.mxu0 %v44
    %141 = vmatprep.subr.mxu0 0.0
    %142 = vmatpush1.msra.mxu0 %v43
    %143 = vmatprep.subr.mxu0 0.0
    %144 = vmatpush1.msra.mxu0 %v42
    %145 = vmatprep.subr.mxu0 0.0
    %146 = vmatpush2.msra.mxu0 %v73
    %147 = vmatprep.subr.mxu0 0.0
    %148 = vmatpush2.msra.mxu0 %v72
    %149 = vmatprep.subr.mxu0 0.0
    %150 = vmatpush2.msra.mxu0 %v71
    %151 = vmatprep.subr.mxu0 0.0
    %152 = vmatpush2.msra.mxu0 %v70
    %153 = vmatprep.subr.mxu0 0.0
    %154 = vmatpush2.msra.mxu0 %v69
    %155 = vmatprep.subr.mxu0 0.0
    %156 = vmatpush2.msra.mxu0 %v68
    %157 = vmatprep.subr.mxu0 0.0
    %158 = vmatpush2.msra.mxu0 %v67
    %159 = vmatprep.subr.mxu0 0.0
    %160 = vmatpush2.msra.mxu0 %v66
    %161 = vmatprep.subr.mxu0 0.0
    %162 = vmatpush2.msra.mxu0 %v65
    %163 = vmatprep.subr.mxu0 0.0
    %164 = vmatpush2.msra.mxu0 %v64
    %165 = vmatprep.subr.mxu0 0.0
    %166 = vmatpush2.msra.mxu0 %v63
    %167 = vmatprep.subr.mxu0 0.0
    %168 = vmatpush2.msra.mxu0 %v62
    %169 = vmatprep.subr.mxu0 0.0
    %170 = vmatpush2.msra.mxu0 %v61
    %171 = vmatprep.subr.mxu0 0.0
    %172 = vmatpush2.msra.mxu0 %v60
    %173 = vmatprep.subr.mxu0 0.0
    %174 = vmatpush2.msra.mxu0 %v59
    %175 = vmatprep.subr.mxu0 0.0
    %176 = vmatpush2.msra.mxu0 %v58
    %177 = vmatprep.mubr.f32.mxu0 %v103
    %178 = vmatmul.mubr.f32.gmra.mxu0 %v95
    %v179 = vpop.f32.mrf.mxu0
    %v180 = vadd.f32 %v85, %v179
    %v181 = vpop.f32.mrf.mxu0
    %182 = vdwg.mxu0
    %183 = vmatprep.subr.mxu0 0.0
    %184 = vmatpush1.msra.mxu0 0.0
    %185 = vmatprep.subr.mxu0 0.0
    %186 = vmatpush1.msra.mxu0 0.0
    %187 = vmatprep.subr.mxu0 0.0
    %188 = vmatpush1.msra.mxu0 0.0
    %189 = vmatprep.subr.mxu0 0.0
    %190 = vmatpush1.msra.mxu0 0.0
    %191 = vmatprep.subr.mxu0 0.0
    %192 = vmatpush1.msra.mxu0 0.0
    %193 = vmatprep.subr.mxu0 0.0
    %194 = vmatpush1.msra.mxu0 0.0
    %195 = vmatprep.subr.mxu0 0.0
    %196 = vmatpush1.msra.mxu0 0.0
    %197 = vmatprep.subr.mxu0 0.0
    %198 = vmatpush1.msra.mxu0 0.0
    %199 = vmatprep.subr.mxu0 0.0
    %200 = vmatpush1.msra.mxu0 0.0
    %201 = vmatprep.subr.mxu0 0.0
    %202 = vmatpush1.msra.mxu0 0.0
    %203 = vmatprep.subr.mxu0 0.0
    %204 = vmatpush1.msra.mxu0 %v111
    %205 = vmatprep.subr.mxu0 0.0
    %206 = vmatpush1.msra.mxu0 %v78
    %207 = vmatprep.subr.mxu0 0.0
    %208 = vmatpush1.msra.mxu0 %v77
    %209 = vmatprep.subr.mxu0 0.0
    %210 = vmatpush1.msra.mxu0 %v76
    %211 = vmatprep.subr.mxu0 0.0
    %212 = vmatpush1.msra.mxu0 %v75
    %213 = vmatprep.subr.mxu0 0.0
    %214 = vmatpush1.msra.mxu0 %v74
    %215 = vmatprep.subr.mxu0 0.0
    %216 = vmatpush2.msra.mxu0 0.0
    %217 = vmatprep.subr.mxu0 0.0
    %218 = vmatpush2.msra.mxu0 0.0
    %219 = vmatprep.subr.mxu0 0.0
    %220 = vmatpush2.msra.mxu0 0.0
    %221 = vmatprep.subr.mxu0 0.0
    %222 = vmatpush2.msra.mxu0 0.0
    %223 = vmatprep.subr.mxu0 0.0
    %224 = vmatpush2.msra.mxu0 0.0
    %225 = vmatprep.subr.mxu0 0.0
    %226 = vmatpush2.msra.mxu0 0.0
    %227 = vmatprep.subr.mxu0 0.0
    %228 = vmatpush2.msra.mxu0 0.0
    %229 = vmatprep.subr.mxu0 0.0
    %230 = vmatpush2.msra.mxu0 0.0
    %231 = vmatprep.subr.mxu0 0.0
    %232 = vmatpush2.msra.mxu0 0.0
    %233 = vmatprep.subr.mxu0 0.0
    %234 = vmatpush2.msra.mxu0 0.0
    %235 = vmatprep.subr.mxu0 0.0
    %236 = vmatpush2.msra.mxu0 0.0
    %237 = vmatprep.subr.mxu0 0.0
    %238 = vmatpush2.msra.mxu0 0.0
    %239 = vmatprep.subr.mxu0 0.0
    %240 = vmatpush2.msra.mxu0 0.0
    %241 = vmatprep.subr.mxu0 0.0
    %242 = vmatpush2.msra.mxu0 0.0
    %243 = vmatprep.subr.mxu0 0.0
    %244 = vmatpush2.msra.mxu0 0.0
    %245 = vmatprep.subr.mxu0 0.0
    %246 = vmatpush2.msra.mxu0 0.0
    %247 = vmatprep.mubr.f32.mxu0 0.0
    %248 = vmatmul.mubr.f32.gmra.mxu0 %v107
    %v249 = vpop.f32.mrf.mxu0
    %v250 = vadd.f32 %v180, %v249
    %v251 = vpop.f32.mrf.mxu0
    %252 = vdwg.mxu0
    %vm253 = vcmask 812032
    %254 = vst.msk [vmem:[#allocation7] sm:$0x3] %vm253, %v250
    // Predicated region
    $region22: #{tpu_custom_call.1} parent=1 // pred_check
      _
    $region23: #{tpu_custom_call.1} parent=1 // pred_check_branch
      %256 = sbr.rel (0) target = $region25
    $region24: #{tpu_custom_call.1} parent=1 // pred_region
      %s258 = ssub.s32 32, 32
      %259 = vsyncadd [#allocation4], %s258
      %s261 = sshll.u32 [#allocation7], 4
      %s262 = int_to_ptr.vmem [resolvable:$true] %s261
      %264 = dma.vmem_to_hbm [thread:$0]  %s262, 32, %s3, [#allocation4]
    $region25: #{tpu_custom_call.1} parent=1 // pred_fallthru
      _
    // Predicated region
    $region26: #{tpu_custom_call.1} parent=1 // pred_check
      _
    $region27: #{tpu_custom_call.1} parent=1 // pred_check_branch
      %266 = sbr.rel (0) target = $region29
    $region28: #{tpu_custom_call.1} parent=1 // pred_region
      %267 = dma.done [#allocation4], 32
    $region29: #{tpu_custom_call.1} parent=1 // pred_fallthru
      _
    %268 = vsyncpa [#allocation3], 1
    %269 = vsyncpa [#allocation6], 1
    %270 = vsyncpa [#allocation4], 1

</llo_original>
